<compile_context>
chip_gen: v6e
topology: v6e:2x2x1
jax: 0.10.0
libtpu: 0.0.40
codegen_flags: <defaults>
</compile_context>

<pallas_src>
import functools

import jax
import jax.numpy as jnp
from jax import lax
from jax.experimental import pallas as pl
from jax.experimental.pallas import tpu as pltpu


def _round_up(x, m):
    return (x + m - 1) // m * m


# ---------------------------------------------------------------------------
# Tiled linear:  y = x @ w^T + b   (weight transposed ONCE in the wrapper,
# kernel runs a plain NN matmul with f32 accumulation)
# ---------------------------------------------------------------------------
def _linear_kernel(x_ref, w_ref, b_ref, o_ref):
    acc = jnp.dot(x_ref[...], w_ref[...], preferred_element_type=jnp.float32)
    o_ref[...] = (acc + b_ref[...].astype(jnp.float32)).astype(o_ref.dtype)


def linear_pallas(x, w, b, *, tile_m=512, weight_block_bytes=8 << 20):
    """x: (N, E), w: (O, E), b: (O,) -> (N, O)   (matches F.linear)."""
    N, E = x.shape
    O, E2 = w.shape
    assert E == E2

    wt = w.T                      # one-time relayout so the kernel is an NN matmul
    b2 = b.reshape(1, O)

    TM = N if N <= tile_m else tile_m
    wsz = jnp.dtype(w.dtype).itemsize
    isz = jnp.dtype(x.dtype).itemsize
    if O <= 256 or O * E * wsz <= weight_block_bytes:
        TO = O                    # weight fully resident (read exactly once)
    else:
        TO = max(128, (weight_block_bytes // (E * wsz)) // 128 * 128)
        TO = min(TO, O)
    grid_m = pl.cdiv(N, TM)
    grid_o = pl.cdiv(O, TO)

    est = (2 * TM * E * isz                 # x tiles (double-buffered)
           + 2 * TM * TO * isz              # out tiles
           + 2 * TO * E * wsz               # weight tiles
           + 2 * _round_up(TO, 128) * wsz   # bias
           + (4 << 20))
    vmem_limit = int(min(48 << 20, max(est, 16 << 20)))

    # grid = (o, m): the weight block index is constant over the inner m loop,
    # so each weight tile is DMA'd exactly once (resident across row tiles).
    return pl.pallas_call(
        _linear_kernel,
        out_shape=jax.ShapeDtypeStruct((N, O), x.dtype),
        grid=(grid_o, grid_m),
        in_specs=[
            pl.BlockSpec((TM, E), lambda o, m: (m, 0)),
            pl.BlockSpec((E, TO), lambda o, m: (0, o)),
            pl.BlockSpec((1, TO), lambda o, m: (0, o)),
        ],
        out_specs=pl.BlockSpec((TM, TO), lambda o, m: (m, o)),
        compiler_params=pltpu.CompilerParams(
            dimension_semantics=("parallel", "parallel"),
            vmem_limit_bytes=vmem_limit),
    )(x, wt, b2)


# ---------------------------------------------------------------------------
# Flash-style multi-head attention
#   input : packed qkv viewed as (L, B, 3, H, Dh)  (free view of the in-proj output)
#   output: (L, B, H, Dh)   (free view of (L, B, E); already tgt-major row order)
# ---------------------------------------------------------------------------
def _flash_mha_kernel(q_ref, k_ref, v_ref, o_ref, m_scr, l_scr, acc_scr,
                      *, num_heads, approx_recip):
    kv_idx = pl.program_id(2)
    n_kv = pl.num_programs(2)

    @pl.when(kv_idx == 0)
    def _init():
        m_scr[...] = jnp.full(m_scr.shape, -jnp.inf, dtype=m_scr.dtype)
        l_scr[...] = jnp.zeros(l_scr.shape, dtype=l_scr.dtype)
        acc_scr[...] = jnp.zeros(acc_scr.shape, dtype=acc_scr.dtype)

    q = q_ref[...]     # (TLq, H, Dh); 1/sqrt(Dh) already folded into the in-proj
    k = k_ref[...]     # (TKv, H, Dh)
    v = v_ref[...]     # (TKv, H, Dh)

    alphas, pvs = [], []
    for h in range(num_heads):                      # static unroll over heads
        q_h = q[:, h, :]                            # (TLq, Dh)
        k_h = k[:, h, :]                            # (TKv, Dh)
        v_h = v[:, h, :]                            # (TKv, Dh)

        # s = q_h @ k_h^T  (NT contraction over Dh), f32 scores
        s = lax.dot_general(q_h, k_h,
                            dimension_numbers=(((1,), (1,)), ((), ())),
                            preferred_element_type=jnp.float32)      # (TLq, TKv)

        m_prev = m_scr[h]                                            # (TLq, 1)
        m_new = jnp.maximum(m_prev, jnp.max(s, axis=-1, keepdims=True))
        alpha = jnp.exp(m_prev - m_new)
        p = jnp.exp(s - m_new)                                       # (TLq, TKv) f32

        l_scr[h] = alpha * l_scr[h] + jnp.sum(p, axis=-1, keepdims=True)
        m_scr[h] = m_new

        pv = lax.dot_general(p.astype(v_h.dtype), v_h,
                             dimension_numbers=(((1,), (0,)), ((), ())),
                             preferred_element_type=jnp.float32)     # (TLq, Dh)
        alphas.append(alpha)
        pvs.append(pv)

    # ONE full-width accumulator update per kv step (no per-head column RMW).
    alpha_full = jnp.stack(alphas, axis=1)           # (TLq, H, 1)
    pv_full = jnp.stack(pvs, axis=1)                 # (TLq, H, Dh)
    acc_scr[...] = alpha_full * acc_scr[...] + pv_full

    @pl.when(kv_idx == n_kv - 1)
    def _finalize():
        inv_l = jnp.stack(
            [pl.reciprocal(l_scr[h], approx=approx_recip) for h in range(num_heads)],
            axis=1)                                  # (TLq, H, 1)
        # single full-block finalize store
        o_ref[...] = (acc_scr[...] * inv_l).astype(o_ref.dtype)


def _pick_q_tile(L):
    if L <= 512:
        return L
    for c in (256, 128):
        if L % c == 0:
            return c
    return 256          # trailing partial block is handled by the cdiv grid


def _pick_kv_tile(L):
    if L <= 1024:
        return L
    for c in (512, 256):
        if L % c == 0:
            return c
    # TODO(synk): masked KV tiling for long lengths with no 256/512 divisor.
    return L


def attention_pallas(qkv, num_heads, head_dim, *, approx_recip=True):
    """qkv: (L, B, 3, H, Dh) packed projections -> (L, B, H, Dh) attention output."""
    L, B, three, H, Dh = qkv.shape
    assert three == 3 and H == num_heads and Dh == head_dim

    TLq = _pick_q_tile(L)
    TKv = _pick_kv_tile(L)
    n_lq = pl.cdiv(L, TLq)
    n_kv = L // TKv

    kernel = functools.partial(_flash_mha_kernel, num_heads=H,
                               approx_recip=approx_recip)

    q_spec = pl.BlockSpec((TLq, pl.Squeezed(), pl.Squeezed(), H, Dh),
                          lambda b, lq, kv: (lq, b, 0, 0, 0))
    k_spec = pl.BlockSpec((TKv, pl.Squeezed(), pl.Squeezed(), H, Dh),
                          lambda b, lq, kv: (kv, b, 1, 0, 0))
    v_spec = pl.BlockSpec((TKv, pl.Squeezed(), pl.Squeezed(), H, Dh),
                          lambda b, lq, kv: (kv, b, 2, 0, 0))
    o_spec = pl.BlockSpec((TLq, pl.Squeezed(), H, Dh),
                          lambda b, lq, kv: (lq, b, 0, 0))

    isz = jnp.dtype(qkv.dtype).itemsize
    est = (2 * TLq * H * Dh * isz                    # q tiles (double-buffered)
           + 4 * TKv * H * Dh * isz                  # k + v tiles
           + 2 * TLq * H * Dh * isz                  # out tiles
           + TLq * H * _round_up(Dh, 128) * 4        # acc scratch (lane-padded)
           + 2 * H * _round_up(TLq, 8) * 128 * 4     # m / l scratch (lane-padded)
           + (4 << 20))
    vmem_limit = int(min(48 << 20, max(est, 16 << 20)))

    return pl.pallas_call(
        kernel,
        out_shape=jax.ShapeDtypeStruct((L, B, H, Dh), qkv.dtype),
        grid=(B, n_lq, n_kv),
        in_specs=[q_spec, k_spec, v_spec],
        out_specs=o_spec,
        scratch_shapes=[
            pltpu.VMEM((H, TLq, 1), jnp.float32),    # running max
            pltpu.VMEM((H, TLq, 1), jnp.float32),    # running denominator
            pltpu.VMEM((TLq, H, Dh), jnp.float32),   # output accumulator
        ],
        compiler_params=pltpu.CompilerParams(
            dimension_semantics=("parallel", "parallel", "arbitrary"),
            vmem_limit_bytes=vmem_limit),
    )(qkv, qkv, qkv)


# ---------------------------------------------------------------------------
# Module forward (glue in plain JAX; hot paths in the Pallas kernels above)
# ---------------------------------------------------------------------------
def multi_head_attention_forward(query, key, value, embed_dim_to_check, num_heads,
                                 in_proj_weight, in_proj_bias,
                                 bias_k=None, bias_v=None, add_zero_attn=False,
                                 dropout_p=0.0,
                                 out_proj_weight=None, out_proj_bias=None,
                                 training=True, need_weights=False,
                                 attn_mask=None, is_causal=False,
                                 prefix=None, batch_weight=None):
    tgt_len, bsz, embed_dim = query.shape
    src_len = key.shape[0]
    assert embed_dim == embed_dim_to_check
    head_dim = embed_dim // num_heads
    assert head_dim * num_heads == embed_dim
    assert key.shape == value.shape
    # Implemented path: packed self-attention, no mask / dropout / prefix.
    assert src_len == tgt_len
    assert attn_mask is None and not is_causal
    assert bias_k is None and bias_v is None and not add_zero_attn
    assert dropout_p == 0.0
    assert prefix is None and batch_weight is None
    assert not need_weights
    assert out_proj_weight is not None and out_proj_bias is not None
    # TODO(synk): prefix / _CG_tuning branch, attn_mask / is_causal, bias_k/v,
    #             add_zero_attn, dropout>0, need_weights=True not implemented.

    scale = 1.0 / float(head_dim) ** 0.5
    # Fold the 1/sqrt(head_dim) query scaling into the q rows of the packed
    # in-projection weights / bias (one-time constant transform).
    row_scale = jnp.concatenate([
        jnp.full((embed_dim,), scale, dtype=in_proj_weight.dtype),
        jnp.ones((2 * embed_dim,), dtype=in_proj_weight.dtype)])
    w_in = in_proj_weight * row_scale[:, None]
    b_in = in_proj_bias * row_scale

    # --- packed in-projection over (L*B, E) rows (q is k is v path) ---
    x = query.reshape(tgt_len * bsz, embed_dim)
    qkv = linear_pallas(x, w_in, b_in)                            # (L*B, 3E)

    # Free view (no HBM transpose): (L, B, 3, H, Dh)
    qkv5 = qkv.reshape(tgt_len, bsz, 3, num_heads, head_dim)

    # --- flash-style attention; output written directly as (L, B, H, Dh) ---
    attn = attention_pallas(qkv5, num_heads, head_dim)            # (L, B, H, Dh)

    # --- output projection; rows are already in (tgt-major, batch-minor) order ---
    rows = attn.reshape(tgt_len * bsz, embed_dim)
    out = linear_pallas(rows, out_proj_weight, out_proj_bias)     # (L*B, E)
    return out.reshape(tgt_len, bsz, embed_dim), None


# ---------------------------------------------------------------------------
# Pure-JAX reference (for the correctness check only)
# ---------------------------------------------------------------------------
def _reference(query, num_heads, w_in, b_in, w_out, b_out):
    L, B, E = query.shape
    Dh = E // num_heads
    qkv = query.reshape(L * B, E) @ w_in.T + b_in
    qkv = qkv.reshape(L, B, 3, E)
    q, k, v = qkv[:, :, 0, :], qkv[:, :, 1, :], qkv[:, :, 2, :]

    def rs(t):
        return t.reshape(L, B * num_heads, Dh).transpose(1, 0, 2).reshape(B, num_heads, L, Dh)

    q, k, v = rs(q), rs(k), rs(v)
    s = jnp.einsum("bhqd,bhkd->bhqk", q, k) / jnp.sqrt(Dh).astype(q.dtype)
    p = jax.nn.softmax(s, axis=-1)
    o = jnp.einsum("bhqk,bhkd->bhqd", p, v)
    o = o.transpose(2, 0, 1, 3).reshape(L * B, E)
    o = o @ w_out.T + b_out
    return o.reshape(L, B, E)


if __name__ == "__main__":
    # small shapes consistent with the module's forward
    tgt_len, bsz, embed_dim, num_heads = 8, 2, 32, 4

    rng = jax.random.PRNGKey(0)
    k1, k2, k3, k4, k5 = jax.random.split(rng, 5)

    query = jax.random.normal(k1, (tgt_len, bsz, embed_dim), dtype=jnp.float32)
    # self-attention: key/value alias query (q is k is v path)
    in_proj_weight = 0.1 * jax.random.normal(k2, (3 * embed_dim, embed_dim), dtype=jnp.float32)
    in_proj_bias = 0.1 * jax.random.normal(k3, (3 * embed_dim,), dtype=jnp.float32)
    out_proj_weight = 0.1 * jax.random.normal(k4, (embed_dim, embed_dim), dtype=jnp.float32)
    out_proj_bias = 0.1 * jax.random.normal(k5, (embed_dim,), dtype=jnp.float32)

    out, _ = multi_head_attention_forward(
        query, query, query, embed_dim, num_heads,
        in_proj_weight, in_proj_bias,
        bias_k=None, bias_v=None, add_zero_attn=False, dropout_p=0.0,
        out_proj_weight=out_proj_weight, out_proj_bias=out_proj_bias,
        training=True, need_weights=False, attn_mask=None, is_causal=False)
    out = jax.block_until_ready(out)

    ref = _reference(query, num_heads, in_proj_weight, in_proj_bias,
                     out_proj_weight, out_proj_bias)
    assert out.shape == (tgt_len, bsz, embed_dim)
    # approx reciprocal in the softmax finalize -> slightly looser tolerance
    assert jnp.allclose(out, ref, atol=2e-3, rtol=2e-3), "mismatch vs JAX reference"

    print("KERNEL_OK")
</pallas_src>

<mosaic_0001>
module attributes {stable_mosaic.version = 11 : i64} {
  func.func @_linear_kernel(%arg0: i32, %arg1: i32, %arg2: memref<16x32xf32, #tpu.memory_space<vmem>>, %arg3: memref<32x96xf32, #tpu.memory_space<vmem>>, %arg4: memref<1x96xf32, #tpu.memory_space<vmem>>, %arg5: memref<16x96xf32, #tpu.memory_space<vmem>>) attributes {dimension_semantics = [#tpu.dimension_semantics<parallel>, #tpu.dimension_semantics<parallel>], iteration_bounds = array<i64: 1, 1>, scalar_prefetch = 0 : i64, scratch_operands = 0 : i64, tpu.core_type = #tpu.core_type<tc>, window_params = [{transform_indices = @transform_0, window_bounds = array<i64: 16, 32>}, {transform_indices = @transform_1, window_bounds = array<i64: 32, 96>}, {transform_indices = @transform_2, window_bounds = array<i64: 1, 96>}, {transform_indices = @transform_3, window_bounds = array<i64: 16, 96>}]} {
    %c0 = arith.constant 0 : index
    %c0_0 = arith.constant 0 : index
    %0 = vector.load %arg2[%c0, %c0_0] : memref<16x32xf32, #tpu.memory_space<vmem>>, vector<16x32xf32>
    %c0_1 = arith.constant 0 : index
    %c0_2 = arith.constant 0 : index
    %1 = vector.load %arg3[%c0_1, %c0_2] : memref<32x96xf32, #tpu.memory_space<vmem>>, vector<32x96xf32>
    %cst = arith.constant dense<0.000000e+00> : vector<16x96xf32>
    %2 = tpu.matmul %0, %1, %cst {dimension_numbers = #tpu.dot_dimension_numbers<[1], [0], [0], [1], [0, 0, 1, 1], [], []>} : vector<16x32xf32>, vector<32x96xf32>, vector<16x96xf32> -> vector<16x96xf32>
    %c0_3 = arith.constant 0 : index
    %c0_4 = arith.constant 0 : index
    %3 = vector.load %arg4[%c0_3, %c0_4] : memref<1x96xf32, #tpu.memory_space<vmem>>, vector<1x96xf32>
    %4 = vector.broadcast %3 : vector<1x96xf32> to vector<16x96xf32>
    %5 = arith.addf %2, %4 : vector<16x96xf32>
    %c0_5 = arith.constant 0 : index
    %c0_6 = arith.constant 0 : index
    %6 = vector.load %arg5[%c0_5, %c0_6] : memref<16x96xf32, #tpu.memory_space<vmem>>, vector<16x96xf32>
    tpu.vector_store %arg5[%c0_5, %c0_6], %5 {strides = array<i32>} : memref<16x96xf32, #tpu.memory_space<vmem>>, vector<16x96xf32>,
    return
  }
  func.func @transform_0(%arg0: i32, %arg1: i32) -> (i32, i32) {
    %c0_i32 = arith.constant 0 : i32
    %c0_i32_0 = arith.constant 0 : i32
    return %arg1, %c0_i32 : i32, i32
  }
  func.func @transform_1(%arg0: i32, %arg1: i32) -> (i32, i32) {
    %c0_i32 = arith.constant 0 : i32
    %c0_i32_0 = arith.constant 0 : i32
    return %c0_i32, %arg0 : i32, i32
  }
  func.func @transform_2(%arg0: i32, %arg1: i32) -> (i32, i32) {
    %c0_i32 = arith.constant 0 : i32
    %c0_i32_0 = arith.constant 0 : i32
    return %c0_i32, %arg0 : i32, i32
  }
  func.func @transform_3(%arg0: i32, %arg1: i32) -> (i32, i32) {
    %c0_i32 = arith.constant 0 : i32
    return %arg1, %arg0 : i32, i32
  }
}

</mosaic_0001>

<llo_original>
// kernel: tpu_custom_call.1
$region0: #{tpu_custom_call.1}
  #allocation0 [shape = 'u32[]', space=smem, size = 0x4, offset = 0x4, fixed_abs, tag = 'smem constant byte address 0x4 - core index']
  #allocation1 [shape = 'u32[144,128]{1,0:T(1,128)}', space=vmem, size = 0x12000, scoped, tag = 'internal scratch']
  %s0 = inlined_call_operand.hbm [shape: f32[16,32], index: 0, kind: input, shape index: {}]
  %s1 = inlined_call_operand.hbm [shape: f32[32,96], index: 1, kind: input, shape index: {}]
  %s2 = inlined_call_operand.vmem [shape: f32[1,96], index: 2, kind: input, shape index: {}]
  %s3 = inlined_call_operand.hbm [shape: f32[16,96], index: 3, kind: output, shape index: {}]
  %s4 = sld [smem:[#allocation0]]
  $region30: #{tpu_custom_call.1} parent=0
    _
  %s6 = ssub.s32 1, %s4
  %s7 = scalar_select 0, %s6, %s4
  $region1: #{tpu_custom_call.1} parent=0
    #allocation2 [shape = 'u8[8192]{0}', space=vmem, size = 0x2000, scoped, tag = 'input window, operand 0, single buffered']
    #allocation3 [shape = 's32[1]{0}', space=sflag, size = 0x4, scoped, tag = 'scoped memory for tpu_custom_call.1']
    #allocation4 [shape = 's32[1]{0}', space=sflag, size = 0x4, scoped, tag = 'scoped memory for tpu_custom_call.1']
    #allocation5 [shape = 'u8[16384]{0}', space=vmem, size = 0x4000, scoped, tag = 'input window, operand 1, single buffered']
    #allocation6 [shape = 's32[1]{0}', space=sflag, size = 0x4, scoped, tag = 'scoped memory for tpu_custom_call.1']
    #allocation7 [shape = 'u8[8192]{0}', space=vmem, size = 0x2000, scoped, tag = 'output window, operand 0, single buffered']
    %8 = vsyncpa [#allocation3], 0
    %9 = vsyncpa [#allocation6], 0
    %10 = vsyncpa [#allocation4], 0
    // Predicated region
    $region2: #{tpu_custom_call.1} parent=1 // pred_check
      _
    $region3: #{tpu_custom_call.1} parent=1 // pred_check_branch
      %12 = sbr.rel (0) target = $region5
    $region4: #{tpu_custom_call.1} parent=1 // pred_region
      %s14 = ssub.s32 256, 256
      %15 = vsyncadd [#allocation3], %s14
      %s16 = sshll.u32 [#allocation2], 4
      %s17 = int_to_ptr.vmem [resolvable:$true] %s16
      %22 = dma.hbm_to_vmem [thread:$0]  %s0, 256, %s17, [#allocation3], 128, 128, 8
    $region5: #{tpu_custom_call.1} parent=1 // pred_fallthru
      _
    // Predicated region
    $region6: #{tpu_custom_call.1} parent=1 // pred_check
      _
    $region7: #{tpu_custom_call.1} parent=1 // pred_check_branch
      %24 = sbr.rel (0) target = $region9
    $region8: #{tpu_custom_call.1} parent=1 // pred_region
      %s26 = ssub.s32 512, 512
      %27 = vsyncadd [#allocation6], %s26
      %s28 = sshll.u32 [#allocation5], 4
      %s29 = int_to_ptr.vmem [resolvable:$true] %s28
      %34 = dma.hbm_to_vmem [thread:$0]  %s1, 512, %s29, [#allocation6], 128, 128, 8
    $region9: #{tpu_custom_call.1} parent=1 // pred_fallthru
      _
    // Predicated region
    $region10: #{tpu_custom_call.1} parent=1 // pred_check
      _
    $region11: #{tpu_custom_call.1} parent=1 // pred_check_branch
      %36 = sbr.rel (0) target = $region13
    $region12: #{tpu_custom_call.1} parent=1 // pred_region
      _
    $region13: #{tpu_custom_call.1} parent=1 // pred_fallthru
      _
    // Predicated region
    $region14: #{tpu_custom_call.1} parent=1 // pred_check
      _
    $region15: #{tpu_custom_call.1} parent=1 // pred_check_branch
      %38 = sbr.rel (0) target = $region17
    $region16: #{tpu_custom_call.1} parent=1 // pred_region
      %39 = dma.done [#allocation3], 256
    $region17: #{tpu_custom_call.1} parent=1 // pred_fallthru
      _
    // Predicated region
    $region18: #{tpu_custom_call.1} parent=1 // pred_check
      _
    $region19: #{tpu_custom_call.1} parent=1 // pred_check_branch
      %41 = sbr.rel (0) target = $region21
    $region20: #{tpu_custom_call.1} parent=1 // pred_region
      %42 = dma.done [#allocation6], 512
    $region21: #{tpu_custom_call.1} parent=1 // pred_fallthru
      _
    %v43 = vld [vmem:[#allocation2] sm:$0xff]
    %v44 = vld [vmem:[#allocation2 + $0x8] sm:$0xff]
    %v45 = vld [vmem:[#allocation5] sm:$0xff]
    %v46 = vld [vmem:[#allocation5 + $0x8] sm:$0xff]
    %v47 = vld [vmem:[#allocation5 + $0x10] sm:$0xff]
    %v48 = vld [vmem:[#allocation5 + $0x18] sm:$0xff]
    %v49 = vld [vmem:[%s2] sm:$0x1]
    %v51 = vlaneseq
    %v52 = vshrl.u32 %v51, 7
    %v53 = vsub.s32 0, %v52
    %v54 = vrot.slane %v49, %v53
    %vm56 = vcmask 261120
    %v58 = vsel %vm56, %v43, 0
    %v61 = vsel %vm56, %v44, 0
    %63 = vmatprep.subr.mxu0 0.0
    %64 = vmatpush1.msra.mxu0 0.0
    %65 = vmatprep.subr.mxu0 0.0
    %66 = vmatpush1.msra.mxu0 0.0
    %67 = vmatprep.subr.mxu0 0.0
    %68 = vmatpush1.msra.mxu0 0.0
    %69 = vmatprep.subr.mxu0 0.0
    %70 = vmatpush1.msra.mxu0 0.0
    %71 = vmatprep.subr.mxu0 0.0
    %72 = vmatpush1.msra.mxu0 0.0
    %73 = vmatprep.subr.mxu0 0.0
    %74 = vmatpush1.msra.mxu0 0.0
    %75 = vmatprep.subr.mxu0 0.0
    %76 = vmatpush1.msra.mxu0 0.0
    %77 = vmatprep.subr.mxu0 0.0
    %78 = vmatpush1.msra.mxu0 0.0
    %79 = vmatprep.subr.mxu0 0.0
    %80 = vmatpush1.msra.mxu0 0.0
    %81 = vmatprep.subr.mxu0 0.0
    %82 = vmatpush1.msra.mxu0 0.0
    %83 = vmatprep.subr.mxu0 0.0
    %84 = vmatpush1.msra.mxu0 0.0
    %85 = vmatprep.subr.mxu0 0.0
    %86 = vmatpush1.msra.mxu0 0.0
    %87 = vmatprep.subr.mxu0 0.0
    %88 = vmatpush1.msra.mxu0 %v48
    %89 = vmatprep.subr.mxu0 0.0
    %90 = vmatpush1.msra.mxu0 %v47
    %91 = vmatprep.subr.mxu0 0.0
    %92 = vmatpush1.msra.mxu0 %v46
    %93 = vmatprep.subr.mxu0 0.0
    %94 = vmatpush1.msra.mxu0 %v45
    %95 = vmatprep.subr.mxu0 0.0
    %96 = vmatpush2.msra.mxu0 0.0
    %97 = vmatprep.subr.mxu0 0.0
    %98 = vmatpush2.msra.mxu0 0.0
    %99 = vmatprep.subr.mxu0 0.0
    %100 = vmatpush2.msra.mxu0 0.0
    %101 = vmatprep.subr.mxu0 0.0
    %102 = vmatpush2.msra.mxu0 0.0
    %103 = vmatprep.subr.mxu0 0.0
    %104 = vmatpush2.msra.mxu0 0.0
    %105 = vmatprep.subr.mxu0 0.0
    %106 = vmatpush2.msra.mxu0 0.0
    %107 = vmatprep.subr.mxu0 0.0
    %108 = vmatpush2.msra.mxu0 0.0
    %109 = vmatprep.subr.mxu0 0.0
    %110 = vmatpush2.msra.mxu0 0.0
    %111 = vmatprep.subr.mxu0 0.0
    %112 = vmatpush2.msra.mxu0 0.0
    %113 = vmatprep.subr.mxu0 0.0
    %114 = vmatpush2.msra.mxu0 0.0
    %115 = vmatprep.subr.mxu0 0.0
    %116 = vmatpush2.msra.mxu0 0.0
    %117 = vmatprep.subr.mxu0 0.0
    %118 = vmatpush2.msra.mxu0 0.0
    %119 = vmatprep.subr.mxu0 0.0
    %120 = vmatpush2.msra.mxu0 0.0
    %121 = vmatprep.subr.mxu0 0.0
    %122 = vmatpush2.msra.mxu0 0.0
    %123 = vmatprep.subr.mxu0 0.0
    %124 = vmatpush2.msra.mxu0 0.0
    %125 = vmatprep.subr.mxu0 0.0
    %126 = vmatpush2.msra.mxu0 0.0
    %127 = vmatprep.mubr.f32.mxu0 0.0
    %128 = vmatmul.mubr.f32.gmra.mxu0 %v58
    %v129 = vpop.f32.mrf.mxu0
    %v130 = vadd.f32 %v54, %v129
    %v131 = vpop.f32.mrf.mxu0
    %132 = vmatprep.mubr.f32.mxu0 0.0
    %133 = vmatmul.mubr.f32.gmra.mxu0 %v61
    %v134 = vpop.f32.mrf.mxu0
    %v135 = vadd.f32 %v54, %v134
    %v136 = vpop.f32.mrf.mxu0
    %137 = vdwg.mxu0
    %vm138 = vcmask 785408
    %139 = vst.msk [vmem:[#allocation7] sm:$0xff] %vm138, %v130
    %140 = vst.msk [vmem:[#allocation7 + $0x8] sm:$0xff] %vm138, %v135
    // Predicated region
    $region22: #{tpu_custom_call.1} parent=1 // pred_check
      _
    $region23: #{tpu_custom_call.1} parent=1 // pred_check_branch
      %142 = sbr.rel (0) target = $region25
    $region24: #{tpu_custom_call.1} parent=1 // pred_region
      %s144 = ssub.s32 256, 256
      %145 = vsyncadd [#allocation4], %s144
      %s146 = sshll.u32 [#allocation7], 4
      %s147 = int_to_ptr.vmem [resolvable:$true] %s146
      %152 = dma.vmem_to_hbm [thread:$0]  %s147, 256, %s3, [#allocation4], 128, 128, 8
    $region25: #{tpu_custom_call.1} parent=1 // pred_fallthru
      _
    // Predicated region
    $region26: #{tpu_custom_call.1} parent=1 // pred_check
      _
    $region27: #{tpu_custom_call.1} parent=1 // pred_check_branch
      %154 = sbr.rel (0) target = $region29
    $region28: #{tpu_custom_call.1} parent=1 // pred_region
      %155 = dma.done [#allocation4], 256
    $region29: #{tpu_custom_call.1} parent=1 // pred_fallthru
      _
    %156 = vsyncpa [#allocation3], 1
    %157 = vsyncpa [#allocation6], 1
    %158 = vsyncpa [#allocation4], 1

</llo_original>
